<compile_context>
chip_gen: v7x
topology: tpu7x:2x2x1
jax: 0.10.0
libtpu: 0.0.40
codegen_flags: <defaults>
</compile_context>

<pallas_src>
import functools

import jax
import jax.numpy as jnp
from jax import lax
from jax.experimental import pallas as pl
from jax.experimental.pallas import tpu as pltpu

L = 5          # hidden width from the module
NBINS = 20     # one-hot bucket count from the module


def _round_up(n, m):
    return ((n + m - 1) // m) * m


def mutation_kernel(x_ref, w1a_ref, tab_ref, w2s_ref, consts_ref, out_ref):
    x = x_ref[...]                                          # (TB, M) f32
    tb = x.shape[0]

    # xSum -> one-hot index.  int32 truncation of the f32 sum matches torch
    # .long() exactly for binary inputs.  (If sum(x) >= 20 the one-hot row is
    # all zeros instead of PyTorch's out-of-range index error.)
    idx = jnp.sum(x, axis=1, keepdims=True).astype(jnp.int32)          # (TB, 1)
    bins = lax.broadcasted_iota(jnp.int32, (tb, NBINS), 1)             # (TB, 20)
    onehot = (bins == idx).astype(x.dtype)                             # (TB, 20)

    # lin1 on concat([x, onehot]) expressed as two MXU passes (no in-kernel
    # concat).  b1 is pre-folded into tab, so no separate bias add.
    z = (jnp.dot(x, w1a_ref[...], preferred_element_type=jnp.float32)
         + jnp.dot(onehot, tab_ref[...], preferred_element_type=jnp.float32))  # (TB, L)

    x1 = z[:, 0:1]                                          # pre-tanh column-0 skip
    h = jnp.tanh(z)                                         # (TB, L)  ("xNP")

    b2s = consts_ref[0:1, :]                                # (1, Npad) padded lin2 bias
    gate = consts_ref[1:2, :]                               # (1, Npad) skip-add gate

    # Single lane-dense (TB, Npad) store:
    #   columns [0:M]     = lin2(h) + b2 + x1    (gate selects the skip-add)
    #   columns [M:M+L]   = h                    (identity block inside w2s)
    #   columns [M+L: ]   = 0
    slab = (jnp.dot(h, w2s_ref[...], preferred_element_type=jnp.float32)
            + b2s + x1 * gate)                              # (TB, Npad)
    out_ref[...] = slab.astype(out_ref.dtype)


def prepare_mutation_params(lin1_w, lin1_b, lin2_w, lin2_b):
    """One-time (outside the hot loop) parameter repacking.

    lin1_w: (L, M+20), lin1_b: (L,), lin2_w: (M, L), lin2_b: (M,)  -- PyTorch
    Linear layout (out_features, in_features).
    """
    l, mp = lin1_w.shape
    m = mp - NBINS
    npad = _round_up(m + l, 128)

    w1a = jnp.transpose(lin1_w[:, :m]).astype(jnp.float32)            # (M, L)
    # one-hot lookup table with the lin1 bias folded in: tab[k] = w1b[k] + b1
    tab = (jnp.transpose(lin1_w[:, m:]) + lin1_b[None, :]).astype(jnp.float32)  # (20, L)

    w2s = jnp.zeros((l, npad), jnp.float32)
    w2s = w2s.at[:, :m].set(jnp.transpose(lin2_w).astype(jnp.float32))
    w2s = w2s.at[:, m:m + l].set(jnp.eye(l, dtype=jnp.float32))       # h passthrough

    consts = jnp.zeros((2, npad), jnp.float32)
    consts = consts.at[0, :m].set(lin2_b.astype(jnp.float32))         # padded b2
    consts = consts.at[1, :m].set(1.0)                                # skip-add gate
    return w1a, tab, w2s, consts


def mutation_model_forward(x, w1a, tab, w2s, consts, *, tb=1024):
    """x: (B, M) f32.  Returns (out (B, M), h (B, L))."""
    b, m = x.shape
    lh = w1a.shape[1]
    npad = w2s.shape[1]

    # Batch tile: multiple of 8 sublanes; clamp to the (padded) batch size.
    tb = max(8, min(tb, _round_up(b, 8)))
    bp = _round_up(b, tb)
    if bp != b:
        x = jnp.pad(x, ((0, bp - b), (0, 0)))   # zero rows -> bin 0, harmless

    grid = (bp // tb,)
    const = lambda i: (0, 0)     # weights: resident in VMEM across grid steps

    slab = pl.pallas_call(
        mutation_kernel,
        out_shape=jax.ShapeDtypeStruct((bp, npad), jnp.float32),
        grid_spec=pltpu.PrefetchScalarGridSpec(
            num_scalar_prefetch=0,
            grid=grid,
            in_specs=[
                pl.BlockSpec((tb, m), lambda i: (i, 0)),      # x, pipelined
                pl.BlockSpec((m, lh), const),                 # w1a
                pl.BlockSpec((NBINS, lh), const),             # tab (w1b + b1)
                pl.BlockSpec((lh, npad), const),              # [w2 | I | 0]
                pl.BlockSpec((2, npad), const),               # [b2 ; skip gate]
            ],
            out_specs=pl.BlockSpec((tb, npad), lambda i: (i, 0)),
        ),
        compiler_params=pltpu.CompilerParams(
            dimension_semantics=("parallel",)),               # megacore / 2 TC
    )(x, w1a, tab, w2s, consts)

    out = slab[:b, :m]
    h = slab[:b, m:m + lh]
    return out, h


def reference_forward(x, lin1_w, lin1_b, lin2_w, lin2_b):
    """Pure-JAX reference mirroring the PyTorch forward."""
    b, m = x.shape
    xsum = jnp.sum(x, axis=1).astype(jnp.int32)
    onehot = jax.nn.one_hot(xsum, NBINS, dtype=x.dtype)
    xcat = jnp.concatenate([x, onehot], axis=1)
    z = xcat @ lin1_w.T + lin1_b
    x1 = jnp.repeat(z[:, 0], m).reshape(b, m)
    h = jnp.tanh(z)
    out = h @ lin2_w.T + lin2_b + x1
    return out, h


if __name__ == "__main__":
    B, M = 256, 16   # small shapes; binary x so sum(x) < 20 (one-hot in range)

    key = jax.random.PRNGKey(0)
    kx, k1, k2, k3, k4 = jax.random.split(key, 5)

    # binary mutation vectors, as the module expects
    x = jax.random.bernoulli(kx, p=0.3, shape=(B, M)).astype(jnp.float32)

    # deterministic synthetic parameters (PyTorch Linear layout: (out, in))
    lin1_w = 0.1 * jax.random.normal(k1, (L, M + NBINS), dtype=jnp.float32)
    lin1_b = 0.1 * jax.random.normal(k2, (L,), dtype=jnp.float32)
    lin2_w = 0.1 * jax.random.normal(k3, (M, L), dtype=jnp.float32)
    lin2_b = 0.1 * jax.random.normal(k4, (M,), dtype=jnp.float32)

    # one-time parameter repack (outside the hot path)
    params = prepare_mutation_params(lin1_w, lin1_b, lin2_w, lin2_b)

    # tb=128 -> 2 grid steps at B=256, exercising the pipelined batch grid
    fwd = jax.jit(functools.partial(mutation_model_forward, tb=128))
    out, h = fwd(x, *params)
    jax.block_until_ready((out, h))

    ref_out, ref_h = reference_forward(x, lin1_w, lin1_b, lin2_w, lin2_b)
    assert out.shape == (B, M) and h.shape == (B, L)
    assert jnp.allclose(out, ref_out, atol=1e-4, rtol=1e-4), \
        float(jnp.max(jnp.abs(out - ref_out)))
    assert jnp.allclose(h, ref_h, atol=1e-4, rtol=1e-4), \
        float(jnp.max(jnp.abs(h - ref_h)))

    print("KERNEL_OK")
</pallas_src>

<mosaic_0001>
module attributes {stable_mosaic.version = 11 : i64} {
  func.func @mutation_kernel(%arg0: i32, %arg1: memref<128x16xf32, #tpu.memory_space<vmem>>, %arg2: memref<16x5xf32, #tpu.memory_space<vmem>>, %arg3: memref<20x5xf32, #tpu.memory_space<vmem>>, %arg4: memref<5x128xf32, #tpu.memory_space<vmem>>, %arg5: memref<2x128xf32, #tpu.memory_space<vmem>>, %arg6: memref<128x128xf32, #tpu.memory_space<vmem>>) attributes {dimension_semantics = [#tpu.dimension_semantics<parallel>], iteration_bounds = array<i64: 2>, scalar_prefetch = 0 : i64, scratch_operands = 0 : i64, tpu.core_type = #tpu.core_type<tc>, window_params = [{transform_indices = @transform_0, window_bounds = array<i64: 128, 16>}, {pipeline_mode = #tpu.pipeline_mode<synchronous>, transform_indices = @transform_1, window_bounds = array<i64: 16, 5>}, {pipeline_mode = #tpu.pipeline_mode<synchronous>, transform_indices = @transform_2, window_bounds = array<i64: 20, 5>}, {pipeline_mode = #tpu.pipeline_mode<synchronous>, transform_indices = @transform_3, window_bounds = array<i64: 5, 128>}, {pipeline_mode = #tpu.pipeline_mode<synchronous>, transform_indices = @transform_4, window_bounds = array<i64: 2, 128>}, {transform_indices = @transform_5, window_bounds = array<i64: 128, 128>}]} {
    %c0 = arith.constant 0 : index
    %c0_0 = arith.constant 0 : index
    %0 = vector.load %arg1[%c0, %c0_0] : memref<128x16xf32, #tpu.memory_space<vmem>>, vector<128x16xf32>
    %cst = arith.constant dense<0.000000e+00> : vector<128xf32>
    %1 = vector.multi_reduction <add>, %0, %cst [1] : vector<128x16xf32> to vector<128xf32>
    %2 = vector.shape_cast %1 : vector<128xf32> to vector<128x1xf32>
    %3 = arith.fptosi %2 : vector<128x1xf32> to vector<128x1xi32>
    %4 = tpu.iota {dimensions = array<i32: 1>} : vector<128x20xi32>
    %5 = vector.broadcast %3 : vector<128x1xi32> to vector<128x20xi32>
    %6 = arith.cmpi eq, %4, %5 : vector<128x20xi32>
    %7 = arith.extui %6 : vector<128x20xi1> to vector<128x20xi32>
    %8 = arith.sitofp %7 : vector<128x20xi32> to vector<128x20xf32>
    %c0_1 = arith.constant 0 : index
    %c0_2 = arith.constant 0 : index
    %9 = vector.load %arg2[%c0_1, %c0_2] : memref<16x5xf32, #tpu.memory_space<vmem>>, vector<16x5xf32>
    %cst_3 = arith.constant dense<0.000000e+00> : vector<128x5xf32>
    %10 = tpu.matmul %0, %9, %cst_3 {dimension_numbers = #tpu.dot_dimension_numbers<[1], [0], [0], [1], [0, 0, 1, 1], [], []>} : vector<128x16xf32>, vector<16x5xf32>, vector<128x5xf32> -> vector<128x5xf32>
    %c0_4 = arith.constant 0 : index
    %c0_5 = arith.constant 0 : index
    %11 = vector.load %arg3[%c0_4, %c0_5] : memref<20x5xf32, #tpu.memory_space<vmem>>, vector<20x5xf32>
    %cst_6 = arith.constant dense<0.000000e+00> : vector<128x5xf32>
    %12 = tpu.matmul %8, %11, %cst_6 {dimension_numbers = #tpu.dot_dimension_numbers<[1], [0], [0], [1], [0, 0, 1, 1], [], []>} : vector<128x20xf32>, vector<20x5xf32>, vector<128x5xf32> -> vector<128x5xf32>
    %13 = arith.addf %10, %12 : vector<128x5xf32>
    %14 = vector.extract_strided_slice %13 {offsets = [0, 0], sizes = [128, 1], strides = [1, 1]} : vector<128x5xf32> to vector<128x1xf32>
    %15 = math.tanh %13 : vector<128x5xf32>
    %c0_7 = arith.constant 0 : index
    %c0_8 = arith.constant 0 : index
    %16 = vector.load %arg5[%c0_7, %c0_8] : memref<2x128xf32, #tpu.memory_space<vmem>>, vector<1x128xf32>
    %c1 = arith.constant 1 : index
    %c0_9 = arith.constant 0 : index
    %17 = vector.load %arg5[%c1, %c0_9] : memref<2x128xf32, #tpu.memory_space<vmem>>, vector<1x128xf32>
    %c0_10 = arith.constant 0 : index
    %c0_11 = arith.constant 0 : index
    %18 = vector.load %arg4[%c0_10, %c0_11] : memref<5x128xf32, #tpu.memory_space<vmem>>, vector<5x128xf32>
    %cst_12 = arith.constant dense<0.000000e+00> : vector<128x128xf32>
    %19 = tpu.matmul %15, %18, %cst_12 {dimension_numbers = #tpu.dot_dimension_numbers<[1], [0], [0], [1], [0, 0, 1, 1], [], []>} : vector<128x5xf32>, vector<5x128xf32>, vector<128x128xf32> -> vector<128x128xf32>
    %20 = vector.broadcast %16 : vector<1x128xf32> to vector<128x128xf32>
    %21 = arith.addf %19, %20 : vector<128x128xf32>
    %22 = vector.broadcast %14 : vector<128x1xf32> to vector<128x128xf32>
    %23 = vector.broadcast %17 : vector<1x128xf32> to vector<128x128xf32>
    %24 = arith.mulf %22, %23 : vector<128x128xf32>
    %25 = arith.addf %21, %24 : vector<128x128xf32>
    %c0_13 = arith.constant 0 : index
    %c0_14 = arith.constant 0 : index
    %26 = vector.load %arg6[%c0_13, %c0_14] : memref<128x128xf32, #tpu.memory_space<vmem>>, vector<128x128xf32>
    tpu.vector_store %arg6[%c0_13, %c0_14], %25 {strides = array<i32>} : memref<128x128xf32, #tpu.memory_space<vmem>>, vector<128x128xf32>,
    return
  }
  func.func @transform_0(%arg0: i32) -> (i32, i32) {
    %c0_i32 = arith.constant 0 : i32
    %c0_i32_0 = arith.constant 0 : i32
    return %arg0, %c0_i32 : i32, i32
  }
  func.func @transform_1(%arg0: i32) -> (i32, i32) {
    %c0_i32 = arith.constant 0 : i32
    %c0_i32_0 = arith.constant 0 : i32
    %c0_i32_1 = arith.constant 0 : i32
    return %c0_i32, %c0_i32_0 : i32, i32
  }
  func.func @transform_2(%arg0: i32) -> (i32, i32) {
    %c0_i32 = arith.constant 0 : i32
    %c0_i32_0 = arith.constant 0 : i32
    %c0_i32_1 = arith.constant 0 : i32
    return %c0_i32, %c0_i32_0 : i32, i32
  }
  func.func @transform_3(%arg0: i32) -> (i32, i32) {
    %c0_i32 = arith.constant 0 : i32
    %c0_i32_0 = arith.constant 0 : i32
    %c0_i32_1 = arith.constant 0 : i32
    return %c0_i32, %c0_i32_0 : i32, i32
  }
  func.func @transform_4(%arg0: i32) -> (i32, i32) {
    %c0_i32 = arith.constant 0 : i32
    %c0_i32_0 = arith.constant 0 : i32
    %c0_i32_1 = arith.constant 0 : i32
    return %c0_i32, %c0_i32_0 : i32, i32
  }
  func.func @transform_5(%arg0: i32) -> (i32, i32) {
    %c0_i32 = arith.constant 0 : i32
    %c0_i32_0 = arith.constant 0 : i32
    return %arg0, %c0_i32 : i32, i32
  }
}

</mosaic_0001>

<llo_original>
// kernel: mutation_model_forward.1
$region0: #{mutation_model_forward.1}
  #allocation0 [shape = 'u32[]', space=smem, size = 0x4, offset = 0x4, fixed_abs, tag = 'smem constant byte address 0x4 - core index']
  #allocation1 [shape = 'u32[144,128]{1,0:T(1,128)}', space=vmem, size = 0x12000, scoped, tag = 'internal scratch']
  %s0 = inlined_call_operand.vmem [shape: f32[256,16], index: 0, kind: input, shape index: {}]
  %s1 = inlined_call_operand.vmem [shape: f32[16,5], index: 1, kind: input, shape index: {}]
  %s2 = inlined_call_operand.vmem [shape: f32[20,5], index: 2, kind: input, shape index: {}]
  %s3 = inlined_call_operand.vmem [shape: f32[5,128], index: 3, kind: input, shape index: {}]
  %s4 = inlined_call_operand.vmem [shape: f32[2,128], index: 4, kind: input, shape index: {}]
  %s5 = inlined_call_operand.vmem [shape: f32[256,128], index: 5, kind: output, shape index: {}]
  %s6 = sld [smem:[#allocation0]]
  $region53: #{mutation_model_forward.1} parent=0
    _
  %s8 = ssub.s32 1, %s6
  %s9 = scalar_select 0, %s8, %s6
  loop: start=0, step=1, limit=4
  $region2: #{mutation_model_forward.1} parent=0 // loop_pre_header
    _
  $region3: #{mutation_model_forward.1} parent=0 // loop_header
    %s11 = sphi 0, %s15
    %p12 = scmp.ge.s32.totalorder %s11, 4
    %s21 = sphi 0, %s23
    %s24 = sphi 0, %s21
    %s25 = sphi 0, %s24
    %s41 = sphi 0, %s25
    %s45 = sphi 0, %s45
    %s47 = sphi 0, %s45
    %s48 = sphi 0, %s47
    %s62 = sphi 0, %s48
    %s66 = sphi 0, %s66
    %s68 = sphi 0, %s66
    %s69 = sphi 0, %s68
    %s83 = sphi 0, %s69
    %s87 = sphi 0, %s87
    %s89 = sphi 0, %s87
    %s90 = sphi 0, %s89
    %s104 = sphi 0, %s90
    %s108 = sphi 0, %s108
    %s110 = sphi 0, %s108
    %s111 = sphi 0, %s110
    %s125 = sphi 0, %s111
    %s131 = sphi 0, %s133
    %s134 = sphi 0, %s131
    %s135 = sphi 0, %s134
    %s151 = sphi 0, %s135
  $region4: #{mutation_model_forward.1} parent=0 // loop_header_branch
    %14 = sbr.rel (%p12) target = $region8
  $region5: #{mutation_model_forward.1} parent=0 // loop_body
    %s16 = ssub.s32 %s11, 1
    %s17 = ssub.s32 %s11, 2
    %s18 = sadd.s32 %s11, 1
    %s19 = ssub.s32 %s11, %s18
    %p20 = scmp.eq.s32.totalorder %s19, 0
    %s22 = sadd.s32 %s21, 1
    %s23 = scalar_select %p20, %s21, %s22
    %p26 = pneg %p20
    %p27 = scmp.eq.s32.totalorder %s11, 1
    %p28 = por %p26, %p27
    %p29 = scmp.ne.s32.totalorder %s21, %s24
    %p30 = scmp.eq.s32.totalorder %s11, 0
    %p31 = por %p29, %p30
    %p32 = scmp.ne.s32.totalorder %s21, %s24
    %p33 = scmp.eq.s32.totalorder %s16, 1
    %p34 = por %p32, %p33
    %p35 = scmp.ne.s32.totalorder %s24, %s25
    %p36 = scmp.eq.s32.totalorder %s16, 0
    %p37 = por %p35, %p36
    %p38 = scmp.ne.s32.totalorder %s24, %s25
    %p39 = scmp.eq.s32.totalorder %s17, 1
    %p40 = por %p38, %p39
    %p42 = scmp.ne.s32.totalorder %s25, %s41
    %p43 = scmp.eq.s32.totalorder %s17, 0
    %p44 = por %p42, %p43
    %s46 = sadd.s32 %s45, 1
    %p49 = scmp.eq.s32.totalorder %s11, 1
    %p50 = scmp.ne.s32.totalorder %s45, %s47
    %p51 = scmp.eq.s32.totalorder %s11, 0
    %p52 = por %p50, %p51
    %p53 = scmp.ne.s32.totalorder %s45, %s47
    %p54 = scmp.eq.s32.totalorder %s16, 1
    %p55 = por %p53, %p54
    %p56 = scmp.ne.s32.totalorder %s47, %s48
    %p57 = scmp.eq.s32.totalorder %s16, 0
    %p58 = por %p56, %p57
    %p59 = scmp.ne.s32.totalorder %s47, %s48
    %p60 = scmp.eq.s32.totalorder %s17, 1
    %p61 = por %p59, %p60
    %p63 = scmp.ne.s32.totalorder %s48, %s62
    %p64 = scmp.eq.s32.totalorder %s17, 0
    %p65 = por %p63, %p64
    %s67 = sadd.s32 %s66, 1
    %p70 = scmp.eq.s32.totalorder %s11, 1
    %p71 = scmp.ne.s32.totalorder %s66, %s68
    %p72 = scmp.eq.s32.totalorder %s11, 0
    %p73 = por %p71, %p72
    %p74 = scmp.ne.s32.totalorder %s66, %s68
    %p75 = scmp.eq.s32.totalorder %s16, 1
    %p76 = por %p74, %p75
    %p77 = scmp.ne.s32.totalorder %s68, %s69
    %p78 = scmp.eq.s32.totalorder %s16, 0
    %p79 = por %p77, %p78
    %p80 = scmp.ne.s32.totalorder %s68, %s69
    %p81 = scmp.eq.s32.totalorder %s17, 1
    %p82 = por %p80, %p81
    %p84 = scmp.ne.s32.totalorder %s69, %s83
    %p85 = scmp.eq.s32.totalorder %s17, 0
    %p86 = por %p84, %p85
    %s88 = sadd.s32 %s87, 1
    %p91 = scmp.eq.s32.totalorder %s11, 1
    %p92 = scmp.ne.s32.totalorder %s87, %s89
    %p93 = scmp.eq.s32.totalorder %s11, 0
    %p94 = por %p92, %p93
    %p95 = scmp.ne.s32.totalorder %s87, %s89
    %p96 = scmp.eq.s32.totalorder %s16, 1
    %p97 = por %p95, %p96
    %p98 = scmp.ne.s32.totalorder %s89, %s90
    %p99 = scmp.eq.s32.totalorder %s16, 0
    %p100 = por %p98, %p99
    %p101 = scmp.ne.s32.totalorder %s89, %s90
    %p102 = scmp.eq.s32.totalorder %s17, 1
    %p103 = por %p101, %p102
    %p105 = scmp.ne.s32.totalorder %s90, %s104
    %p106 = scmp.eq.s32.totalorder %s17, 0
    %p107 = por %p105, %p106
    %s109 = sadd.s32 %s108, 1
    %p112 = scmp.eq.s32.totalorder %s11, 1
    %p113 = scmp.ne.s32.totalorder %s108, %s110
    %p114 = scmp.eq.s32.totalorder %s11, 0
    %p115 = por %p113, %p114
    %p116 = scmp.ne.s32.totalorder %s108, %s110
    %p117 = scmp.eq.s32.totalorder %s16, 1
    %p118 = por %p116, %p117
    %p119 = scmp.ne.s32.totalorder %s110, %s111
    %p120 = scmp.eq.s32.totalorder %s16, 0
    %p121 = por %p119, %p120
    %p122 = scmp.ne.s32.totalorder %s110, %s111
    %p123 = scmp.eq.s32.totalorder %s17, 1
    %p124 = por %p122, %p123
    %p126 = scmp.ne.s32.totalorder %s111, %s125
    %p127 = scmp.eq.s32.totalorder %s17, 0
    %p128 = por %p126, %p127
    %s129 = ssub.s32 %s11, %s18
    %p130 = scmp.eq.s32.totalorder %s129, 0
    %s132 = sadd.s32 %s131, 1
    %s133 = scalar_select %p130, %s131, %s132
    %p136 = pneg %p130
    %p137 = scmp.eq.s32.totalorder %s11, 1
    %p138 = por %p136, %p137
    %p139 = scmp.ne.s32.totalorder %s131, %s134
    %p140 = scmp.eq.s32.totalorder %s11, 0
    %p141 = por %p139, %p140
    %p142 = scmp.ne.s32.totalorder %s131, %s134
    %p143 = scmp.eq.s32.totalorder %s16, 1
    %p144 = por %p142, %p143
    %p145 = scmp.ne.s32.totalorder %s134, %s135
    %p146 = scmp.eq.s32.totalorder %s16, 0
    %p147 = por %p145, %p146
    %p148 = scmp.ne.s32.totalorder %s134, %s135
    %p149 = scmp.eq.s32.totalorder %s17, 1
    %p150 = por %p148, %p149
    %p152 = scmp.ne.s32.totalorder %s135, %s151
    %p153 = scmp.eq.s32.totalorder %s17, 0
    %p154 = por %p152, %p153
    %p155 = scmp.le.s32.totalorder 1, %s11
    %p156 = scmp.lt.s32.totalorder %s11, 3
    %p157 = pnand %p155, %p156
    %p158 = pneg %p157
    // Predicated region
    $region9: #{mutation_model_forward.1} parent=5 // pred_check
      _
    $region10: #{mutation_model_forward.1} parent=5 // pred_check_branch
      %160 = sbr.rel (%p157) target = $region12
    $region11: #{mutation_model_forward.1} parent=5 // pred_region
      %s161 = ssub.s32 %s11, 1
      // Predicated region
      $region13: #{mutation_model_forward.1} parent=11 // pred_check
        %p162 = pneg %p58
      $region14: #{mutation_model_forward.1} parent=11 // pred_check_branch
        %164 = sbr.rel (%p162) target = $region16
      $region15: #{mutation_model_forward.1} parent=11 // pred_region
        _
      $region16: #{mutation_model_forward.1} parent=11 // pred_fallthru
        _
      // Predicated region
      $region17: #{mutation_model_forward.1} parent=11 // pred_check
        %p165 = pneg %p79
      $region18: #{mutation_model_forward.1} parent=11 // pred_check_branch
        %167 = sbr.rel (%p165) target = $region20
      $region19: #{mutation_model_forward.1} parent=11 // pred_region
        _
      $region20: #{mutation_model_forward.1} parent=11 // pred_fallthru
        _
      // Predicated region
      $region21: #{mutation_model_forward.1} parent=11 // pred_check
        %p168 = pneg %p100
      $region22: #{mutation_model_forward.1} parent=11 // pred_check_branch
        %170 = sbr.rel (%p168) target = $region24
      $region23: #{mutation_model_forward.1} parent=11 // pred_region
        _
      $region24: #{mutation_model_forward.1} parent=11 // pred_fallthru
        _
      // Predicated region
      $region25: #{mutation_model_forward.1} parent=11 // pred_check
        %p171 = pneg %p121
      $region26: #{mutation_model_forward.1} parent=11 // pred_check_branch
        %173 = sbr.rel (%p171) target = $region28
      $region27: #{mutation_model_forward.1} parent=11 // pred_region
        _
      $region28: #{mutation_model_forward.1} parent=11 // pred_fallthru
        _
    $region12: #{mutation_model_forward.1} parent=5 // pred_fallthru
      _
    %p174 = scmp.lt.s32.totalorder %s11, 2
    // Predicated region
    $region29: #{mutation_model_forward.1} parent=5 // pred_check
      %p175 = pneg %p174
    $region30: #{mutation_model_forward.1} parent=5 // pred_check_branch
      %177 = sbr.rel (%p175) target = $region32
    $region31: #{mutation_model_forward.1} parent=5 // pred_region
      // Predicated region
      $region33: #{mutation_model_forward.1} parent=31 // pred_check
        %p178 = pneg %p31
      $region34: #{mutation_model_forward.1} parent=31 // pred_check_branch
        %180 = sbr.rel (%p178) target = $region36
      $region35: #{mutation_model_forward.1} parent=31 // pred_region
        %s181 = smul.u32 16, %s11
        %p182 = scmp.lt.s32.totalorder %s181, 31
        %s183 = scalar_select %p182, %s181, 31
        %s184 = smul.addr %s183, 8
        %s185 = scalar_lea.vmem %s0, %s184
        %s186 = smul.u32 16, %s11
      $region36: #{mutation_model_forward.1} parent=31 // pred_fallthru
        _
    $region32: #{mutation_model_forward.1} parent=5 // pred_fallthru
      _
    %p187 = scmp.le.s32.totalorder 1, %s11
    %p188 = scmp.lt.s32.totalorder %s11, 3
    %p189 = pnand %p187, %p188
    %p190 = pneg %p189
    // Predicated region
    $region37: #{mutation_model_forward.1} parent=5 // pred_check
      _
    $region38: #{mutation_model_forward.1} parent=5 // pred_check_branch
      %192 = sbr.rel (%p189) target = $region40
    $region39: #{mutation_model_forward.1} parent=5 // pred_region
      %s193 = ssub.s32 %s11, 1
      %s194 = smul.u32 16, %s16
      %p195 = scmp.lt.s32.totalorder %s194, 31
      %s196 = scalar_select %p195, %s194, 31
      %s197 = smul.addr %s196, 8
      %s198 = scalar_lea.vmem %s0, %s197
      %p199 = pneg %p37
      %p200 = pneg %p34
      %p201 = pneg %p58
      %p202 = pneg %p55
      %p203 = pneg %p79
      %p204 = pneg %p76
      %p205 = pneg %p100
      %p206 = pneg %p97
      %p207 = pneg %p121
      %p208 = pneg %p118
      %p209 = pneg %p147
      %p210 = pneg %p144
      %s211 = smul.u32 16, %s16
      %p212 = scmp.lt.s32.totalorder %s211, 31
      %s213 = scalar_select %p212, %s211, 31
      %s214 = smul.addr %s213, 8
      %s215 = scalar_lea.vmem %s5, %s214
      %s216 = smul.u32 16, %s16
      %p217 = scmp.lt.s32.totalorder %s216, 31
      %s218 = scalar_select %p217, %s216, 31
      %s219 = smul.addr %s218, 8
      %s220 = scalar_lea.vmem %s0, %s219
      %s221 = smul.u32 16, %s16
      %s222 = smul.u32 16, %s16
      %p223 = scmp.lt.s32.totalorder %s222, 31
      %s224 = scalar_select %p223, %s222, 31
      %s225 = smul.addr %s224, 8
      %s226 = scalar_lea.vmem %s5, %s225
      %s227 = smul.u32 16, %s16
      %v228 = vld [vmem:[%s220] sm:$0xff]
      %v229 = vld [vmem:[%s220 + $0x8] sm:$0xff]
      %v230 = vld [vmem:[%s220 + $0x10] sm:$0xff]
      %v231 = vld [vmem:[%s220 + $0x18] sm:$0xff]
      %v232 = vld [vmem:[%s220 + $0x20] sm:$0xff]
      %v233 = vld [vmem:[%s220 + $0x28] sm:$0xff]
      %v234 = vld [vmem:[%s220 + $0x30] sm:$0xff]
      %v235 = vld [vmem:[%s220 + $0x38] sm:$0xff]
      %v236 = vld [vmem:[%s220 + $0x40] sm:$0xff]
      %v237 = vld [vmem:[%s220 + $0x48] sm:$0xff]
      %v238 = vld [vmem:[%s220 + $0x50] sm:$0xff]
      %v239 = vld [vmem:[%s220 + $0x58] sm:$0xff]
      %v240 = vld [vmem:[%s220 + $0x60] sm:$0xff]
      %v241 = vld [vmem:[%s220 + $0x68] sm:$0xff]
      %v242 = vld [vmem:[%s220 + $0x70] sm:$0xff]
      %v243 = vld [vmem:[%s220 + $0x78] sm:$0xff]
      %vm244 = vcmask 130048
      %v245 = vsel %vm244, %v228, 0.0
      %246 = vadd.xlane.f32.xlu0 %v245
      %v247 = vpop.xlane.xlu0 %246
      %v248 = vsel %vm244, %v229, 0.0
      %249 = vadd.xlane.f32.xlu0 %v248
      %v250 = vpop.xlane.xlu0 %249
      %v251 = vsel %vm244, %v230, 0.0
      %252 = vadd.xlane.f32.xlu0 %v251
      %v253 = vpop.xlane.xlu0 %252
      %v254 = vsel %vm244, %v231, 0.0
      %255 = vadd.xlane.f32.xlu0 %v254
      %v256 = vpop.xlane.xlu0 %255
      %v257 = vsel %vm244, %v232, 0.0
      %258 = vadd.xlane.f32.xlu0 %v257
      %v259 = vpop.xlane.xlu0 %258
      %v260 = vsel %vm244, %v233, 0.0
      %261 = vadd.xlane.f32.xlu0 %v260
      %v262 = vpop.xlane.xlu0 %261
      %v263 = vsel %vm244, %v234, 0.0
      %264 = vadd.xlane.f32.xlu0 %v263
      %v265 = vpop.xlane.xlu0 %264
      %v266 = vsel %vm244, %v235, 0.0
      %267 = vadd.xlane.f32.xlu0 %v266
      %v268 = vpop.xlane.xlu0 %267
      %v269 = vsel %vm244, %v236, 0.0
      %270 = vadd.xlane.f32.xlu0 %v269
      %v271 = vpop.xlane.xlu0 %270
      %v272 = vsel %vm244, %v237, 0.0
      %273 = vadd.xlane.f32.xlu0 %v272
      %v274 = vpop.xlane.xlu0 %273
      %v275 = vsel %vm244, %v238, 0.0
      %276 = vadd.xlane.f32.xlu0 %v275
      %v277 = vpop.xlane.xlu0 %276
      %v278 = vsel %vm244, %v239, 0.0
      %279 = vadd.xlane.f32.xlu0 %v278
      %v280 = vpop.xlane.xlu0 %279
      %v281 = vsel %vm244, %v240, 0.0
      %282 = vadd.xlane.f32.xlu0 %v281
      %v283 = vpop.xlane.xlu0 %282
      %v284 = vsel %vm244, %v241, 0.0
      %285 = vadd.xlane.f32.xlu0 %v284
      %v286 = vpop.xlane.xlu0 %285
      %v287 = vsel %vm244, %v242, 0.0
      %288 = vadd.xlane.f32.xlu0 %v287
      %v289 = vpop.xlane.xlu0 %288
      %v290 = vsel %vm244, %v243, 0.0
      %291 = vadd.xlane.f32.xlu0 %v290
      %v292 = vpop.xlane.xlu0 %291
      %v293 = vcvt.f32.s32.to.zero.pseudo %v247
      %v294 = vcvt.f32.s32.to.zero.pseudo %v250
      %v295 = vcvt.f32.s32.to.zero.pseudo %v253
      %v296 = vcvt.f32.s32.to.zero.pseudo %v256
      %v297 = vcvt.f32.s32.to.zero.pseudo %v259
      %v298 = vcvt.f32.s32.to.zero.pseudo %v262
      %v299 = vcvt.f32.s32.to.zero.pseudo %v265
      %v300 = vcvt.f32.s32.to.zero.pseudo %v268
      %v301 = vcvt.f32.s32.to.zero.pseudo %v271
      %v302 = vcvt.f32.s32.to.zero.pseudo %v274
      %v303 = vcvt.f32.s32.to.zero.pseudo %v277
      %v304 = vcvt.f32.s32.to.zero.pseudo %v280
      %v305 = vcvt.f32.s32.to.zero.pseudo %v283
      %v306 = vcvt.f32.s32.to.zero.pseudo %v286
      %v307 = vcvt.f32.s32.to.zero.pseudo %v289
      %v308 = vcvt.f32.s32.to.zero.pseudo %v292
      %v309 = vlaneseq
      %v310 = vand.u32 %v309, 127
      %vm311 = vcmp.eq.s32.totalorder %v310, %v293
      %vm312 = vcmp.eq.s32.totalorder %v310, %v294
      %vm313 = vcmp.eq.s32.totalorder %v310, %v295
      %vm314 = vcmp.eq.s32.totalorder %v310, %v296
      %vm315 = vcmp.eq.s32.totalorder %v310, %v297
      %vm316 = vcmp.eq.s32.totalorder %v310, %v298
      %vm317 = vcmp.eq.s32.totalorder %v310, %v299
      %vm318 = vcmp.eq.s32.totalorder %v310, %v300
      %vm319 = vcmp.eq.s32.totalorder %v310, %v301
      %vm320 = vcmp.eq.s32.totalorder %v310, %v302
      %vm321 = vcmp.eq.s32.totalorder %v310, %v303
      %vm322 = vcmp.eq.s32.totalorder %v310, %v304
      %vm323 = vcmp.eq.s32.totalorder %v310, %v305
      %vm324 = vcmp.eq.s32.totalorder %v310, %v306
      %vm325 = vcmp.eq.s32.totalorder %v310, %v307
      %vm326 = vcmp.eq.s32.totalorder %v310, %v308
      %v327 = vsel %vm311, 1, 0
      %v328 = vsel %vm312, 1, 0
      %v329 = vsel %vm313, 1, 0
      %v330 = vsel %vm314, 1, 0
      %v331 = vsel %vm315, 1, 0
      %v332 = vsel %vm316, 1, 0
      %v333 = vsel %vm317, 1, 0
      %v334 = vsel %vm318, 1, 0
      %v335 = vsel %vm319, 1, 0
      %v336 = vsel %vm320, 1, 0
      %v337 = vsel %vm321, 1, 0
      %v338 = vsel %vm322, 1, 0
      %v339 = vsel %vm323, 1, 0
      %v340 = vsel %vm324, 1, 0
      %v341 = vsel %vm325, 1, 0
      %v342 = vsel %vm326, 1, 0
      %v343 = vcvt.s32.f32 %v327
      %v344 = vcvt.s32.f32 %v328
      %v345 = vcvt.s32.f32 %v329
      %v346 = vcvt.s32.f32 %v330
      %v347 = vcvt.s32.f32 %v331
      %v348 = vcvt.s32.f32 %v332
      %v349 = vcvt.s32.f32 %v333
      %v350 = vcvt.s32.f32 %v334
      %v351 = vcvt.s32.f32 %v335
      %v352 = vcvt.s32.f32 %v336
      %v353 = vcvt.s32.f32 %v337
      %v354 = vcvt.s32.f32 %v338
      %v355 = vcvt.s32.f32 %v339
      %v356 = vcvt.s32.f32 %v340
      %v357 = vcvt.s32.f32 %v341
      %v358 = vcvt.s32.f32 %v342
      %v359 = vld [vmem:[%s1] sm:$0xff]
      %v360 = vld [vmem:[%s1 + $0x8] sm:$0xff]
      %v361 = vld [vmem:[%s2] sm:$0xff]
      %v362 = vld [vmem:[%s2 + $0x8] sm:$0xff]
      %v363 = vld [vmem:[%s2 + $0x10] sm:$0xf]
      %vm364 = vcmask 162816
      %v366 = vsel %vm364, %v343, 0
      %v369 = vsel %vm364, %v344, 0
      %v372 = vsel %vm364, %v345, 0
      %v375 = vsel %vm364, %v346, 0
      %v378 = vsel %vm364, %v347, 0
      %v381 = vsel %vm364, %v348, 0
      %v384 = vsel %vm364, %v349, 0
      %v387 = vsel %vm364, %v350, 0
      %v390 = vsel %vm364, %v351, 0
      %v393 = vsel %vm364, %v352, 0
      %v396 = vsel %vm364, %v353, 0
      %v399 = vsel %vm364, %v354, 0
      %v402 = vsel %vm364, %v355, 0
      %v405 = vsel %vm364, %v356, 0
      %v408 = vsel %vm364, %v357, 0
      %v411 = vsel %vm364, %v358, 0
      %vm413 = vcmask 1043456
      %v415 = vsel %vm413, %v363, 0
      %417 = vmatprep.subr.mxu0 0.0
      %418 = vmatpush1.msra.mxu0 %v361
      %419 = vmatprep.subr.mxu0 0.0
      %420 = vmatpush1.msra.mxu0 %v362
      %421 = vmatprep.subr.mxu0 0.0
      %422 = vmatpush1.msra.mxu0 %v415
      %423 = vmatprep.subr.mxu0 0.0
      %424 = vmatpush1.msra.mxu0 0.0
      %425 = vmatprep.subr.mxu0 0.0
      %426 = vmatpush1.msra.mxu0 0.0
      %427 = vmatprep.subr.mxu0 0.0
      %428 = vmatpush1.msra.mxu0 0.0
      %429 = vmatprep.subr.mxu0 0.0
      %430 = vmatpush1.msra.mxu0 0.0
      %431 = vmatprep.subr.mxu0 0.0
      %432 = vmatpush1.msra.mxu0 0.0
      %433 = vmatprep.subr.mxu0 0.0
      %434 = vmatpush1.msra.mxu0 0.0
      %435 = vmatprep.subr.mxu0 0.0
      %436 = vmatpush1.msra.mxu0 0.0
      %437 = vmatprep.subr.mxu0 0.0
      %438 = vmatpush1.msra.mxu0 0.0
      %439 = vmatprep.subr.mxu0 0.0
      %440 = vmatpush1.msra.mxu0 0.0
      %441 = vmatprep.subr.mxu0 0.0
      %442 = vmatpush1.msra.mxu0 0.0
      %443 = vmatprep.subr.mxu0 0.0
      %444 = vmatpush1.msra.mxu0 0.0
      %445 = vmatprep.subr.mxu0 0.0
      %446 = vmatpush1.msra.mxu0 0.0
      %447 = vmatprep.subr.mxu0 0.0
      %448 = vmatpush1.msra.mxu0 0.0
      %449 = vmatprep.subr.mxu0 0.0
      %450 = vmatpush1.msra.mxu0 0.0
      %451 = vmatprep.subr.mxu0 0.0
      %452 = vmatpush1.msra.mxu0 0.0
      %453 = vmatprep.subr.mxu0 0.0
      %454 = vmatpush1.msra.mxu0 0.0
      %455 = vmatprep.subr.mxu0 0.0
      %456 = vmatpush1.msra.mxu0 0.0
      %457 = vmatprep.subr.mxu0 0.0
      %458 = vmatpush1.msra.mxu0 0.0
      %459 = vmatprep.subr.mxu0 0.0
      %460 = vmatpush1.msra.mxu0 0.0
      %461 = vmatprep.subr.mxu0 0.0
      %462 = vmatpush1.msra.mxu0 0.0
      %463 = vmatprep.subr.mxu0 0.0
      %464 = vmatpush1.msra.mxu0 0.0
      %465 = vmatprep.subr.mxu0 0.0
      %466 = vmatpush1.msra.mxu0 0.0
      %467 = vmatprep.subr.mxu0 0.0
      %468 = vmatpush1.msra.mxu0 0.0
      %469 = vmatprep.subr.mxu0 0.0
      %470 = vmatpush1.msra.mxu0 0.0
      %471 = vmatprep.subr.mxu0 0.0
      %472 = vmatpush1.msra.mxu0 0.0
      %473 = vmatprep.subr.mxu0 0.0
      %474 = vmatpush1.msra.mxu0 0.0
      %475 = vmatprep.subr.mxu0 0.0
      %476 = vmatpush1.msra.mxu0 0.0
      %477 = vmatprep.subr.mxu0 0.0
      %478 = vmatpush1.msra.mxu0 0.0
      %479 = vmatprep.subr.mxu0 0.0
      %480 = vmatpush1.msra.mxu0 0.0
      %481 = vmatprep.mubr.f32.mxu0 0.0
      %482 = vmatmul.mubr.f32.gmra.mrb[0].mxu0 %v366
      %v483 = vpop.f32.mrb[0].mxu0
      %v484 = vadd.f32 0.0, %v483
      %v485 = vpop.f32.mrb[0].mxu0
      %486 = vmatprep.mubr.f32.mxu0 0.0
      %487 = vmatmul.mubr.f32.gmra.mrb[0].mxu0 %v369
      %v488 = vpop.f32.mrb[0].mxu0
      %v489 = vadd.f32 0.0, %v488
      %v490 = vpop.f32.mrb[0].mxu0
      %491 = vmatprep.mubr.f32.mxu0 0.0
      %492 = vmatmul.mubr.f32.gmra.mrb[0].mxu0 %v372
      %v493 = vpop.f32.mrb[0].mxu0
      %v494 = vadd.f32 0.0, %v493
      %v495 = vpop.f32.mrb[0].mxu0
      %496 = vmatprep.mubr.f32.mxu0 0.0
      %497 = vmatmul.mubr.f32.gmra.mrb[0].mxu0 %v375
      %v498 = vpop.f32.mrb[0].mxu0
      %v499 = vadd.f32 0.0, %v498
      %v500 = vpop.f32.mrb[0].mxu0
      %501 = vmatprep.mubr.f32.mxu0 0.0
      %502 = vmatmul.mubr.f32.gmra.mrb[0].mxu0 %v378
      %v503 = vpop.f32.mrb[0].mxu0
      %v504 = vadd.f32 0.0, %v503
      %v505 = vpop.f32.mrb[0].mxu0
      %506 = vmatprep.mubr.f32.mxu0 0.0
      %507 = vmatmul.mubr.f32.gmra.mrb[0].mxu0 %v381
      %v508 = vpop.f32.mrb[0].mxu0
      %v509 = vadd.f32 0.0, %v508
      %v510 = vpop.f32.mrb[0].mxu0
      %511 = vmatprep.mubr.f32.mxu0 0.0
      %512 = vmatmul.mubr.f32.gmra.mrb[0].mxu0 %v384
      %v513 = vpop.f32.mrb[0].mxu0
      %v514 = vadd.f32 0.0, %v513
      %v515 = vpop.f32.mrb[0].mxu0
      %516 = vmatprep.mubr.f32.mxu0 0.0
      %517 = vmatmul.mubr.f32.gmra.mrb[0].mxu0 %v387
      %v518 = vpop.f32.mrb[0].mxu0
      %v519 = vadd.f32 0.0, %v518
      %v520 = vpop.f32.mrb[0].mxu0
      %521 = vmatprep.mubr.f32.mxu0 0.0
      %522 = vmatmul.mubr.f32.gmra.mrb[0].mxu0 %v390
      %v523 = vpop.f32.mrb[0].mxu0
      %v524 = vadd.f32 0.0, %v523
      %v525 = vpop.f32.mrb[0].mxu0
      %526 = vmatprep.mubr.f32.mxu0 0.0
      %527 = vmatmul.mubr.f32.gmra.mrb[0].mxu0 %v393
      %v528 = vpop.f32.mrb[0].mxu0
      %v529 = vadd.f32 0.0, %v528
      %v530 = vpop.f32.mrb[0].mxu0
      %531 = vmatprep.mubr.f32.mxu0 0.0
      %532 = vmatmul.mubr.f32.gmra.mrb[0].mxu0 %v396
      %v533 = vpop.f32.mrb[0].mxu0
      %v534 = vadd.f32 0.0, %v533
      %v535 = vpop.f32.mrb[0].mxu0
      %536 = vmatprep.mubr.f32.mxu0 0.0
      %537 = vmatmul.mubr.f32.gmra.mrb[0].mxu0 %v399
      %v538 = vpop.f32.mrb[0].mxu0
      %v539 = vadd.f32 0.0, %v538
      %v540 = vpop.f32.mrb[0].mxu0
      %541 = vmatprep.mubr.f32.mxu0 0.0
      %542 = vmatmul.mubr.f32.gmra.mrb[0].mxu0 %v402
      %v543 = vpop.f32.mrb[0].mxu0
      %v544 = vadd.f32 0.0, %v543
      %v545 = vpop.f32.mrb[0].mxu0
      %546 = vmatprep.mubr.f32.mxu0 0.0
      %547 = vmatmul.mubr.f32.gmra.mrb[0].mxu0 %v405
      %v548 = vpop.f32.mrb[0].mxu0
      %v549 = vadd.f32 0.0, %v548
      %v550 = vpop.f32.mrb[0].mxu0
      %551 = vmatprep.mubr.f32.mxu0 0.0
      %552 = vmatmul.mubr.f32.gmra.mrb[0].mxu0 %v408
      %v553 = vpop.f32.mrb[0].mxu0
      %v554 = vadd.f32 0.0, %v553
      %v555 = vpop.f32.mrb[0].mxu0
      %556 = vmatprep.mubr.f32.mxu0 0.0
      %557 = vmatmul.mubr.f32.gmra.mrb[0].mxu0 %v411
      %v558 = vpop.f32.mrb[0].mxu0
      %v559 = vadd.f32 0.0, %v558
      %v560 = vpop.f32.mrb[0].mxu0
      %561 = vdwg.mxu0
      %v563 = vsel %vm244, %v228, 0
      %v566 = vsel %vm244, %v229, 0
      %v569 = vsel %vm244, %v230, 0
      %v572 = vsel %vm244, %v231, 0
      %v575 = vsel %vm244, %v232, 0
      %v578 = vsel %vm244, %v233, 0
      %v581 = vsel %vm244, %v234, 0
      %v584 = vsel %vm244, %v235, 0
      %v587 = vsel %vm244, %v236, 0
      %v590 = vsel %vm244, %v237, 0
      %v593 = vsel %vm244, %v238, 0
      %v596 = vsel %vm244, %v239, 0
      %v599 = vsel %vm244, %v240, 0
      %v602 = vsel %vm244, %v241, 0
      %v605 = vsel %vm244, %v242, 0
      %v608 = vsel %vm244, %v243, 0
      %610 = vmatprep.subr.mxu0 0.0
      %611 = vmatpush1.msra.mxu0 %v359
      %612 = vmatprep.subr.mxu0 0.0
      %613 = vmatpush1.msra.mxu0 %v360
      %614 = vmatprep.subr.mxu0 0.0
      %615 = vmatpush1.msra.mxu0 0.0
      %616 = vmatprep.subr.mxu0 0.0
      %617 = vmatpush1.msra.mxu0 0.0
      %618 = vmatprep.subr.mxu0 0.0
      %619 = vmatpush1.msra.mxu0 0.0
      %620 = vmatprep.subr.mxu0 0.0
      %621 = vmatpush1.msra.mxu0 0.0
      %622 = vmatprep.subr.mxu0 0.0
      %623 = vmatpush1.msra.mxu0 0.0
      %624 = vmatprep.subr.mxu0 0.0
      %625 = vmatpush1.msra.mxu0 0.0
      %626 = vmatprep.subr.mxu0 0.0
      %627 = vmatpush1.msra.mxu0 0.0
      %628 = vmatprep.subr.mxu0 0.0
      %629 = vmatpush1.msra.mxu0 0.0
      %630 = vmatprep.subr.mxu0 0.0
      %631 = vmatpush1.msra.mxu0 0.0
      %632 = vmatprep.subr.mxu0 0.0
      %633 = vmatpush1.msra.mxu0 0.0
      %634 = vmatprep.subr.mxu0 0.0
      %635 = vmatpush1.msra.mxu0 0.0
      %636 = vmatprep.subr.mxu0 0.0
      %637 = vmatpush1.msra.mxu0 0.0
      %638 = vmatprep.subr.mxu0 0.0
      %639 = vmatpush1.msra.mxu0 0.0
      %640 = vmatprep.subr.mxu0 0.0
      %641 = vmatpush1.msra.mxu0 0.0
      %642 = vmatprep.subr.mxu0 0.0
      %643 = vmatpush1.msra.mxu0 0.0
      %644 = vmatprep.subr.mxu0 0.0
      %645 = vmatpush1.msra.mxu0 0.0
      %646 = vmatprep.subr.mxu0 0.0
      %647 = vmatpush1.msra.mxu0 0.0
      %648 = vmatprep.subr.mxu0 0.0
      %649 = vmatpush1.msra.mxu0 0.0
      %650 = vmatprep.subr.mxu0 0.0
      %651 = vmatpush1.msra.mxu0 0.0
      %652 = vmatprep.subr.mxu0 0.0
      %653 = vmatpush1.msra.mxu0 0.0
      %654 = vmatprep.subr.mxu0 0.0
      %655 = vmatpush1.msra.mxu0 0.0
      %656 = vmatprep.subr.mxu0 0.0
      %657 = vmatpush1.msra.mxu0 0.0
      %658 = vmatprep.subr.mxu0 0.0
      %659 = vmatpush1.msra.mxu0 0.0
      %660 = vmatprep.subr.mxu0 0.0
      %661 = vmatpush1.msra.mxu0 0.0
      %662 = vmatprep.subr.mxu0 0.0
      %663 = vmatpush1.msra.mxu0 0.0
      %664 = vmatprep.subr.mxu0 0.0
      %665 = vmatpush1.msra.mxu0 0.0
      %666 = vmatprep.subr.mxu0 0.0
      %667 = vmatpush1.msra.mxu0 0.0
      %668 = vmatprep.subr.mxu0 0.0
      %669 = vmatpush1.msra.mxu0 0.0
      %670 = vmatprep.subr.mxu0 0.0
      %671 = vmatpush1.msra.mxu0 0.0
      %672 = vmatprep.subr.mxu0 0.0
      %673 = vmatpush1.msra.mxu0 0.0
      %674 = vmatprep.mubr.f32.mxu0 0.0
      %675 = vmatmul.mubr.f32.gmra.mrb[0].mxu0 %v563
      %v676 = vpop.f32.mrb[0].mxu0
      %v677 = vadd.f32 %v484, %v676
      %v678 = vpop.f32.mrb[0].mxu0
      %679 = vmatprep.mubr.f32.mxu0 0.0
      %680 = vmatmul.mubr.f32.gmra.mrb[0].mxu0 %v566
      %v681 = vpop.f32.mrb[0].mxu0
      %v682 = vadd.f32 %v489, %v681
      %v683 = vpop.f32.mrb[0].mxu0
      %684 = vmatprep.mubr.f32.mxu0 0.0
      %685 = vmatmul.mubr.f32.gmra.mrb[0].mxu0 %v569
      %v686 = vpop.f32.mrb[0].mxu0
      %v687 = vadd.f32 %v494, %v686
      %v688 = vpop.f32.mrb[0].mxu0
      %689 = vmatprep.mubr.f32.mxu0 0.0
      %690 = vmatmul.mubr.f32.gmra.mrb[0].mxu0 %v572
      %v691 = vpop.f32.mrb[0].mxu0
      %v692 = vadd.f32 %v499, %v691
      %v693 = vpop.f32.mrb[0].mxu0
      %694 = vmatprep.mubr.f32.mxu0 0.0
      %695 = vmatmul.mubr.f32.gmra.mrb[0].mxu0 %v575
      %v696 = vpop.f32.mrb[0].mxu0
      %v697 = vadd.f32 %v504, %v696
      %v698 = vpop.f32.mrb[0].mxu0
      %699 = vmatprep.mubr.f32.mxu0 0.0
      %700 = vmatmul.mubr.f32.gmra.mrb[0].mxu0 %v578
      %v701 = vpop.f32.mrb[0].mxu0
      %v702 = vadd.f32 %v509, %v701
      %v703 = vpop.f32.mrb[0].mxu0
      %704 = vmatprep.mubr.f32.mxu0 0.0
      %705 = vmatmul.mubr.f32.gmra.mrb[0].mxu0 %v581
      %v706 = vpop.f32.mrb[0].mxu0
      %v707 = vadd.f32 %v514, %v706
      %v708 = vpop.f32.mrb[0].mxu0
      %709 = vmatprep.mubr.f32.mxu0 0.0
      %710 = vmatmul.mubr.f32.gmra.mrb[0].mxu0 %v584
      %v711 = vpop.f32.mrb[0].mxu0
      %v712 = vadd.f32 %v519, %v711
      %v713 = vpop.f32.mrb[0].mxu0
      %714 = vmatprep.mubr.f32.mxu0 0.0
      %715 = vmatmul.mubr.f32.gmra.mrb[0].mxu0 %v587
      %v716 = vpop.f32.mrb[0].mxu0
      %v717 = vadd.f32 %v524, %v716
      %v718 = vpop.f32.mrb[0].mxu0
      %719 = vmatprep.mubr.f32.mxu0 0.0
      %720 = vmatmul.mubr.f32.gmra.mrb[0].mxu0 %v590
      %v721 = vpop.f32.mrb[0].mxu0
      %v722 = vadd.f32 %v529, %v721
      %v723 = vpop.f32.mrb[0].mxu0
      %724 = vmatprep.mubr.f32.mxu0 0.0
      %725 = vmatmul.mubr.f32.gmra.mrb[0].mxu0 %v593
      %v726 = vpop.f32.mrb[0].mxu0
      %v727 = vadd.f32 %v534, %v726
      %v728 = vpop.f32.mrb[0].mxu0
      %729 = vmatprep.mubr.f32.mxu0 0.0
      %730 = vmatmul.mubr.f32.gmra.mrb[0].mxu0 %v596
      %v731 = vpop.f32.mrb[0].mxu0
      %v732 = vadd.f32 %v539, %v731
      %v733 = vpop.f32.mrb[0].mxu0
      %734 = vmatprep.mubr.f32.mxu0 0.0
      %735 = vmatmul.mubr.f32.gmra.mrb[0].mxu0 %v599
      %v736 = vpop.f32.mrb[0].mxu0
      %v737 = vadd.f32 %v544, %v736
      %v738 = vpop.f32.mrb[0].mxu0
      %739 = vmatprep.mubr.f32.mxu0 0.0
      %740 = vmatmul.mubr.f32.gmra.mrb[0].mxu0 %v602
      %v741 = vpop.f32.mrb[0].mxu0
      %v742 = vadd.f32 %v549, %v741
      %v743 = vpop.f32.mrb[0].mxu0
      %744 = vmatprep.mubr.f32.mxu0 0.0
      %745 = vmatmul.mubr.f32.gmra.mrb[0].mxu0 %v605
      %v746 = vpop.f32.mrb[0].mxu0
      %v747 = vadd.f32 %v554, %v746
      %v748 = vpop.f32.mrb[0].mxu0
      %749 = vmatprep.mubr.f32.mxu0 0.0
      %750 = vmatmul.mubr.f32.gmra.mrb[0].mxu0 %v608
      %v751 = vpop.f32.mrb[0].mxu0
      %v752 = vadd.f32 %v559, %v751
      %v753 = vpop.f32.mrb[0].mxu0
      %754 = vdwg.mxu0
      %v755 = vtanh.pop %v677
      %v756 = vtanh.pop %v682
      %v757 = vtanh.pop %v687
      %v758 = vtanh.pop %v692
      %v759 = vtanh.pop %v697
      %v760 = vtanh.pop %v702
      %v761 = vtanh.pop %v707
      %v762 = vtanh.pop %v712
      %v763 = vtanh.pop %v717
      %v764 = vtanh.pop %v722
      %v765 = vtanh.pop %v727
      %v766 = vtanh.pop %v732
      %v767 = vtanh.pop %v737
      %v768 = vtanh.pop %v742
      %v769 = vtanh.pop %v747
      %v770 = vtanh.pop %v752
      %v771 = vld [vmem:[%s4] sm:$0x1]
      %v772 = vld [vmem:[%s4 + $0x1] sm:$0x1]
      %v773 = vld [vmem:[%s3] sm:$0x1f]
      %v774 = vlaneseq
      %v775 = vshrl.u32 %v774, 7
      %v776 = vsub.s32 0, %v775
      %v777 = vrot.slane %v771, %v776
      %vm778 = vcmask 39936
      %v780 = vsel %vm778, %v755, 0
      %v783 = vsel %vm778, %v756, 0
      %v786 = vsel %vm778, %v757, 0
      %v789 = vsel %vm778, %v758, 0
      %v792 = vsel %vm778, %v759, 0
      %v795 = vsel %vm778, %v760, 0
      %v798 = vsel %vm778, %v761, 0
      %v801 = vsel %vm778, %v762, 0
      %v804 = vsel %vm778, %v763, 0
      %v807 = vsel %vm778, %v764, 0
      %v810 = vsel %vm778, %v765, 0
      %v813 = vsel %vm778, %v766, 0
      %v816 = vsel %vm778, %v767, 0
      %v819 = vsel %vm778, %v768, 0
      %v822 = vsel %vm778, %v769, 0
      %v825 = vsel %vm778, %v770, 0
      %vm827 = vcmask 1044480
      %v829 = vsel %vm827, %v773, 0
      %831 = vmatprep.subr.mxu0 0.0
      %832 = vmatpush1.msra.mxu0 %v829
      %833 = vmatprep.subr.mxu0 0.0
      %834 = vmatpush1.msra.mxu0 0.0
      %835 = vmatprep.subr.mxu0 0.0
      %836 = vmatpush1.msra.mxu0 0.0
      %837 = vmatprep.subr.mxu0 0.0
      %838 = vmatpush1.msra.mxu0 0.0
      %839 = vmatprep.subr.mxu0 0.0
      %840 = vmatpush1.msra.mxu0 0.0
      %841 = vmatprep.subr.mxu0 0.0
      %842 = vmatpush1.msra.mxu0 0.0
      %843 = vmatprep.subr.mxu0 0.0
      %844 = vmatpush1.msra.mxu0 0.0
      %845 = vmatprep.subr.mxu0 0.0
      %846 = vmatpush1.msra.mxu0 0.0
      %847 = vmatprep.subr.mxu0 0.0
      %848 = vmatpush1.msra.mxu0 0.0
      %849 = vmatprep.subr.mxu0 0.0
      %850 = vmatpush1.msra.mxu0 0.0
      %851 = vmatprep.subr.mxu0 0.0
      %852 = vmatpush1.msra.mxu0 0.0
      %853 = vmatprep.subr.mxu0 0.0
      %854 = vmatpush1.msra.mxu0 0.0
      %855 = vmatprep.subr.mxu0 0.0
      %856 = vmatpush1.msra.mxu0 0.0
      %857 = vmatprep.subr.mxu0 0.0
      %858 = vmatpush1.msra.mxu0 0.0
      %859 = vmatprep.subr.mxu0 0.0
      %860 = vmatpush1.msra.mxu0 0.0
      %861 = vmatprep.subr.mxu0 0.0
      %862 = vmatpush1.msra.mxu0 0.0
      %863 = vmatprep.subr.mxu0 0.0
      %864 = vmatpush1.msra.mxu0 0.0
      %865 = vmatprep.subr.mxu0 0.0
      %866 = vmatpush1.msra.mxu0 0.0
      %867 = vmatprep.subr.mxu0 0.0
      %868 = vmatpush1.msra.mxu0 0.0
      %869 = vmatprep.subr.mxu0 0.0
      %870 = vmatpush1.msra.mxu0 0.0
      %871 = vmatprep.subr.mxu0 0.0
      %872 = vmatpush1.msra.mxu0 0.0
      %873 = vmatprep.subr.mxu0 0.0
      %874 = vmatpush1.msra.mxu0 0.0
      %875 = vmatprep.subr.mxu0 0.0
      %876 = vmatpush1.msra.mxu0 0.0
      %877 = vmatprep.subr.mxu0 0.0
      %878 = vmatpush1.msra.mxu0 0.0
      %879 = vmatprep.subr.mxu0 0.0
      %880 = vmatpush1.msra.mxu0 0.0
      %881 = vmatprep.subr.mxu0 0.0
      %882 = vmatpush1.msra.mxu0 0.0
      %883 = vmatprep.subr.mxu0 0.0
      %884 = vmatpush1.msra.mxu0 0.0
      %885 = vmatprep.subr.mxu0 0.0
      %886 = vmatpush1.msra.mxu0 0.0
      %887 = vmatprep.subr.mxu0 0.0
      %888 = vmatpush1.msra.mxu0 0.0
      %889 = vmatprep.subr.mxu0 0.0
      %890 = vmatpush1.msra.mxu0 0.0
      %891 = vmatprep.subr.mxu0 0.0
      %892 = vmatpush1.msra.mxu0 0.0
      %893 = vmatprep.subr.mxu0 0.0
      %894 = vmatpush1.msra.mxu0 0.0
      %895 = vmatprep.mubr.f32.mxu0 0.0
      %896 = vmatmul.mubr.f32.gmra.mrb[0].mxu0 %v780
      %v897 = vpop.f32.mrb[0].mxu0
      %v898 = vadd.f32 %v777, %v897
      %v899 = vpop.f32.mrb[0].mxu0
      %900 = vmatprep.mubr.f32.mxu0 0.0
      %901 = vmatmul.mubr.f32.gmra.mrb[0].mxu0 %v783
      %v902 = vpop.f32.mrb[0].mxu0
      %v903 = vadd.f32 %v777, %v902
      %v904 = vpop.f32.mrb[0].mxu0
      %905 = vmatprep.mubr.f32.mxu0 0.0
      %906 = vmatmul.mubr.f32.gmra.mrb[0].mxu0 %v786
      %v907 = vpop.f32.mrb[0].mxu0
      %v908 = vadd.f32 %v777, %v907
      %v909 = vpop.f32.mrb[0].mxu0
      %910 = vmatprep.mubr.f32.mxu0 0.0
      %911 = vmatmul.mubr.f32.gmra.mrb[0].mxu0 %v789
      %v912 = vpop.f32.mrb[0].mxu0
      %v913 = vadd.f32 %v777, %v912
      %v914 = vpop.f32.mrb[0].mxu0
      %915 = vmatprep.mubr.f32.mxu0 0.0
      %916 = vmatmul.mubr.f32.gmra.mrb[0].mxu0 %v792
      %v917 = vpop.f32.mrb[0].mxu0
      %v918 = vadd.f32 %v777, %v917
      %v919 = vpop.f32.mrb[0].mxu0
      %920 = vmatprep.mubr.f32.mxu0 0.0
      %921 = vmatmul.mubr.f32.gmra.mrb[0].mxu0 %v795
      %v922 = vpop.f32.mrb[0].mxu0
      %v923 = vadd.f32 %v777, %v922
      %v924 = vpop.f32.mrb[0].mxu0
      %925 = vmatprep.mubr.f32.mxu0 0.0
      %926 = vmatmul.mubr.f32.gmra.mrb[0].mxu0 %v798
      %v927 = vpop.f32.mrb[0].mxu0
      %v928 = vadd.f32 %v777, %v927
      %v929 = vpop.f32.mrb[0].mxu0
      %930 = vmatprep.mubr.f32.mxu0 0.0
      %931 = vmatmul.mubr.f32.gmra.mrb[0].mxu0 %v801
      %v932 = vpop.f32.mrb[0].mxu0
      %v933 = vadd.f32 %v777, %v932
      %v934 = vpop.f32.mrb[0].mxu0
      %935 = vmatprep.mubr.f32.mxu0 0.0
      %936 = vmatmul.mubr.f32.gmra.mrb[0].mxu0 %v804
      %v937 = vpop.f32.mrb[0].mxu0
      %v938 = vadd.f32 %v777, %v937
      %v939 = vpop.f32.mrb[0].mxu0
      %940 = vmatprep.mubr.f32.mxu0 0.0
      %941 = vmatmul.mubr.f32.gmra.mrb[0].mxu0 %v807
      %v942 = vpop.f32.mrb[0].mxu0
      %v943 = vadd.f32 %v777, %v942
      %v944 = vpop.f32.mrb[0].mxu0
      %945 = vmatprep.mubr.f32.mxu0 0.0
      %946 = vmatmul.mubr.f32.gmra.mrb[0].mxu0 %v810
      %v947 = vpop.f32.mrb[0].mxu0
      %v948 = vadd.f32 %v777, %v947
      %v949 = vpop.f32.mrb[0].mxu0
      %950 = vmatprep.mubr.f32.mxu0 0.0
      %951 = vmatmul.mubr.f32.gmra.mrb[0].mxu0 %v813
      %v952 = vpop.f32.mrb[0].mxu0
      %v953 = vadd.f32 %v777, %v952
      %v954 = vpop.f32.mrb[0].mxu0
      %955 = vmatprep.mubr.f32.mxu0 0.0
      %956 = vmatmul.mubr.f32.gmra.mrb[0].mxu0 %v816
      %v957 = vpop.f32.mrb[0].mxu0
      %v958 = vadd.f32 %v777, %v957
      %v959 = vpop.f32.mrb[0].mxu0
      %960 = vmatprep.mubr.f32.mxu0 0.0
      %961 = vmatmul.mubr.f32.gmra.mrb[0].mxu0 %v819
      %v962 = vpop.f32.mrb[0].mxu0
      %v963 = vadd.f32 %v777, %v962
      %v964 = vpop.f32.mrb[0].mxu0
      %965 = vmatprep.mubr.f32.mxu0 0.0
      %966 = vmatmul.mubr.f32.gmra.mrb[0].mxu0 %v822
      %v967 = vpop.f32.mrb[0].mxu0
      %v968 = vadd.f32 %v777, %v967
      %v969 = vpop.f32.mrb[0].mxu0
      %970 = vmatprep.mubr.f32.mxu0 0.0
      %971 = vmatmul.mubr.f32.gmra.mrb[0].mxu0 %v825
      %v972 = vpop.f32.mrb[0].mxu0
      %v973 = vadd.f32 %v777, %v972
      %v974 = vpop.f32.mrb[0].mxu0
      %975 = vdwg.mxu0
      %977 = vset.pattern.permute.xlu0 0
      %978 = vperm.xlu0 %977, %v677
      %v979 = vpop.permute.xlu0 %978
      %982 = vset.pattern.permute.xlu0 0
      %983 = vperm.xlu0 %982, %v682
      %v984 = vpop.permute.xlu0 %983
      %987 = vset.pattern.permute.xlu0 0
      %988 = vperm.xlu0 %987, %v687
      %v989 = vpop.permute.xlu0 %988
      %992 = vset.pattern.permute.xlu0 0
      %993 = vperm.xlu0 %992, %v692
      %v994 = vpop.permute.xlu0 %993
      %997 = vset.pattern.permute.xlu0 0
      %998 = vperm.xlu0 %997, %v697
      %v999 = vpop.permute.xlu0 %998
      %1002 = vset.pattern.permute.xlu0 0
      %1003 = vperm.xlu0 %1002, %v702
      %v1004 = vpop.permute.xlu0 %1003
      %1007 = vset.pattern.permute.xlu0 0
      %1008 = vperm.xlu0 %1007, %v707
      %v1009 = vpop.permute.xlu0 %1008
      %1012 = vset.pattern.permute.xlu0 0
      %1013 = vperm.xlu0 %1012, %v712
      %v1014 = vpop.permute.xlu0 %1013
      %1017 = vset.pattern.permute.xlu0 0
      %1018 = vperm.xlu0 %1017, %v717
      %v1019 = vpop.permute.xlu0 %1018
      %1022 = vset.pattern.permute.xlu0 0
      %1023 = vperm.xlu0 %1022, %v722
      %v1024 = vpop.permute.xlu0 %1023
      %1027 = vset.pattern.permute.xlu0 0
      %1028 = vperm.xlu0 %1027, %v727
      %v1029 = vpop.permute.xlu0 %1028
      %1032 = vset.pattern.permute.xlu0 0
      %1033 = vperm.xlu0 %1032, %v732
      %v1034 = vpop.permute.xlu0 %1033
      %1037 = vset.pattern.permute.xlu0 0
      %1038 = vperm.xlu0 %1037, %v737
      %v1039 = vpop.permute.xlu0 %1038
      %1042 = vset.pattern.permute.xlu0 0
      %1043 = vperm.xlu0 %1042, %v742
      %v1044 = vpop.permute.xlu0 %1043
      %1047 = vset.pattern.permute.xlu0 0
      %1048 = vperm.xlu0 %1047, %v747
      %v1049 = vpop.permute.xlu0 %1048
      %1052 = vset.pattern.permute.xlu0 0
      %1053 = vperm.xlu0 %1052, %v752
      %v1054 = vpop.permute.xlu0 %1053
      %v1056 = vlaneseq
      %v1057 = vshrl.u32 %v1056, 7
      %v1058 = vsub.s32 0, %v1057
      %v1059 = vrot.slane %v772, %v1058
      %v1060 = vmul.f32 %v979, %v1059
      %v1061 = vmul.f32 %v984, %v1059
      %v1062 = vmul.f32 %v989, %v1059
      %v1063 = vmul.f32 %v994, %v1059
      %v1064 = vmul.f32 %v999, %v1059
      %v1065 = vmul.f32 %v1004, %v1059
      %v1066 = vmul.f32 %v1009, %v1059
      %v1067 = vmul.f32 %v1014, %v1059
      %v1068 = vmul.f32 %v1019, %v1059
      %v1069 = vmul.f32 %v1024, %v1059
      %v1070 = vmul.f32 %v1029, %v1059
      %v1071 = vmul.f32 %v1034, %v1059
      %v1072 = vmul.f32 %v1039, %v1059
      %v1073 = vmul.f32 %v1044, %v1059
      %v1074 = vmul.f32 %v1049, %v1059
      %v1075 = vmul.f32 %v1054, %v1059
      %v1076 = vadd.f32 %v898, %v1060
      %v1077 = vadd.f32 %v903, %v1061
      %v1078 = vadd.f32 %v908, %v1062
      %v1079 = vadd.f32 %v913, %v1063
      %v1080 = vadd.f32 %v918, %v1064
      %v1081 = vadd.f32 %v923, %v1065
      %v1082 = vadd.f32 %v928, %v1066
      %v1083 = vadd.f32 %v933, %v1067
      %v1084 = vadd.f32 %v938, %v1068
      %v1085 = vadd.f32 %v943, %v1069
      %v1086 = vadd.f32 %v948, %v1070
      %v1087 = vadd.f32 %v953, %v1071
      %v1088 = vadd.f32 %v958, %v1072
      %v1089 = vadd.f32 %v963, %v1073
      %v1090 = vadd.f32 %v968, %v1074
      %v1091 = vadd.f32 %v973, %v1075
      %1092 = vst [vmem:[%s226] sm:$0xff] %v1076
      %1093 = vst [vmem:[%s226 + $0x8] sm:$0xff] %v1077
      %1094 = vst [vmem:[%s226 + $0x10] sm:$0xff] %v1078
      %1095 = vst [vmem:[%s226 + $0x18] sm:$0xff] %v1079
      %1096 = vst [vmem:[%s226 + $0x20] sm:$0xff] %v1080
      %1097 = vst [vmem:[%s226 + $0x28] sm:$0xff] %v1081
      %1098 = vst [vmem:[%s226 + $0x30] sm:$0xff] %v1082
      %1099 = vst [vmem:[%s226 + $0x38] sm:$0xff] %v1083
      %1100 = vst [vmem:[%s226 + $0x40] sm:$0xff] %v1084
      %1101 = vst [vmem:[%s226 + $0x48] sm:$0xff] %v1085
      %1102 = vst [vmem:[%s226 + $0x50] sm:$0xff] %v1086
      %1103 = vst [vmem:[%s226 + $0x58] sm:$0xff] %v1087
      %1104 = vst [vmem:[%s226 + $0x60] sm:$0xff] %v1088
      %1105 = vst [vmem:[%s226 + $0x68] sm:$0xff] %v1089
      %1106 = vst [vmem:[%s226 + $0x70] sm:$0xff] %v1090
      %1107 = vst [vmem:[%s226 + $0x78] sm:$0xff] %v1091
      %s1108 = smul.u32 16, %s16
      %p1109 = scmp.lt.s32.totalorder %s1108, 31
      %s1110 = scalar_select %p1109, %s1108, 31
      %s1111 = smul.addr %s1110, 8
      %s1112 = scalar_lea.vmem %s5, %s1111
      // Predicated region
      $region41: #{mutation_model_forward.1} parent=39 // pred_check
        %p1113 = pneg %p144
      $region42: #{mutation_model_forward.1} parent=39 // pred_check_branch
        %1115 = sbr.rel (%p1113) target = $region44
      $region43: #{mutation_model_forward.1} parent=39 // pred_region
        %s1116 = smul.u32 16, %s16
      $region44: #{mutation_model_forward.1} parent=39 // pred_fallthru
        _
    $region40: #{mutation_model_forward.1} parent=5 // pred_fallthru
      _
    %p1117 = scmp.le.s32.totalorder 2, %s11
    // Predicated region
    $region45: #{mutation_model_forward.1} parent=5 // pred_check
      %p1118 = pneg %p1117
    $region46: #{mutation_model_forward.1} parent=5 // pred_check_branch
      %1120 = sbr.rel (%p1118) target = $region48
    $region47: #{mutation_model_forward.1} parent=5 // pred_region
      %s1121 = ssub.s32 %s11, 2
      // Predicated region
      $region49: #{mutation_model_forward.1} parent=47 // pred_check
        %p1122 = pneg %p150
      $region50: #{mutation_model_forward.1} parent=47 // pred_check_branch
        %1124 = sbr.rel (%p1122) target = $region52
      $region51: #{mutation_model_forward.1} parent=47 // pred_region
        %s1125 = smul.u32 16, %s17
        %p1126 = scmp.lt.s32.totalorder %s1125, 31
        %s1127 = scalar_select %p1126, %s1125, 31
        %s1128 = smul.addr %s1127, 8
        %s1129 = scalar_lea.vmem %s5, %s1128
      $region52: #{mutation_model_forward.1} parent=47 // pred_fallthru
        _
    $region48: #{mutation_model_forward.1} parent=5 // pred_fallthru
      _
  $region6: #{mutation_model_forward.1} parent=0 // loop_footer
    %s15 = sadd.s32 1, %s11
  $region7: #{mutation_model_forward.1} parent=0 // loop_footer_branch
    %10 = sbr.rel target = $region3
  $region8: #{mutation_model_forward.1} parent=0 // loop_exit
    _

</llo_original>
